<compile_context>
chip_gen: v7x
topology: tpu7x:2x2x1
jax: 0.10.0
libtpu: 0.0.40
codegen_flags: <defaults>
</compile_context>

<pallas_src>
import functools

import jax
import jax.numpy as jnp
from jax.experimental import pallas as pl
from jax.experimental.pallas import tpu as pltpu


def _shift_cols(x, d):
    """y[:, j] = x[:, j + d] (zero fill at the ends); d is a static Python int.

    Presents the k-th conv tap's operand without building a K-wide im2col buffer.
    (pltpu.roll on the XLU is the slot-rebalancing alternative; the explicit
    slice+concat form is kept for unambiguous shift semantics.)
    """
    if d == 0:
        return x
    c, m = x.shape
    z = jnp.zeros((c, abs(d)), x.dtype)
    if d > 0:
        return jnp.concatenate([x[:, d:], z], axis=1)
    return jnp.concatenate([z, x[:, :m + d]], axis=1)


def _conv_taps(xin, w_ref):
    """'same' Conv1d as K accumulating wide MXU dots.

    xin   : (C, N*Lpad)    compute dtype (bf16 stays bf16 -> full-rate MXU)
    w_ref : (K, Cout, C)   ref, compute dtype
    out   : (Cout, N*Lpad) float32

    Batch is folded into the RHS width, so each tap is ONE wide contraction;
    no per-sample weight broadcast, no im2col blow-up.
    """
    k_taps = w_ref.shape[0]
    p = k_taps // 2
    acc = None
    for k in range(k_taps):                         # static loop, K is tiny
        xk = _shift_cols(xin, k - p)
        y = jnp.dot(w_ref[k], xk, preferred_element_type=jnp.float32)
        acc = y if acc is None else acc + y
    return acc


def _bn_train(a, mask, g, b, inv_cnt, eps, *, relu, remask):
    """Training-mode BatchNorm1d over the valid (N, L) positions (f32 math).

    Two-pass variance (mean, then centered sum of squares) for robustness;
    mask excludes the halo/pad columns from the statistics.
    """
    am = a * mask
    mean = jnp.sum(am, axis=1, keepdims=True) * inv_cnt            # (Cout, 1)
    cen = (a - mean) * mask                                        # zero on pad cols
    var = jnp.sum(cen * cen, axis=1, keepdims=True) * inv_cnt      # biased variance
    h = cen * (jax.lax.rsqrt(var + eps) * g) + b
    if relu:
        h = jnp.maximum(h, 0.0)
    if remask:
        h = h * mask            # zero halo so the next conv sees 'same' zero padding
    return h


def _basic_block_kernel(x_ref, m_ref, w1_ref, g1_ref, b1_ref, w2_ref, g2_ref,
                        b2_ref, o_ref, *, inv_cnt, eps):
    """Whole residual block, VMEM-resident, flat (C, N*Lpad) activations.

    x_ref : (Cin,  N*Lpad) input, compute dtype; real data at cols [P, P+L) per stripe
    m_ref : (1,    N*Lpad) f32 validity mask
    w*_ref: (K, Cout, C)   per-tap conv weights, compute dtype
    g*/b* : (Cout, 1)      f32 BN affine params
    o_ref : (Cout, N*Lpad) output (lane-dense: last dim is a multiple of 128)
    """
    cdtype = x_ref.dtype
    mask = m_ref[...]

    a1 = _conv_taps(x_ref[...], w1_ref)                                    # conv1
    h1 = _bn_train(a1, mask, g1_ref[...], b1_ref[...], inv_cnt, eps,
                   relu=True, remask=True)                                 # bn1 + relu
    a2 = _conv_taps(h1.astype(cdtype), w2_ref)                             # conv2
    h2 = _bn_train(a2, mask, g2_ref[...], b2_ref[...], inv_cnt, eps,
                   relu=False, remask=False)                               # bn2

    # Residual (downsample=None -> identity): re-read x at the epilogue so no f32
    # copy of the input stays live through the conv/BN stages; final relu.
    res = x_ref[...].astype(jnp.float32)
    o_ref[...] = jnp.maximum(h2 + res, 0.0).astype(o_ref.dtype)


def _vmem_bytes_estimate(cin, cout, nlp, itemsize):
    act_in = cin * nlp * itemsize
    act_out = cout * nlp * itemsize
    act_f32 = cout * nlp * 4
    shifted = cin * nlp * itemsize
    # x + out + mask + transient shifted conv operand + ~5 live f32 activations + slack
    return act_in + act_out + nlp * 4 + shifted + 5 * act_f32 + (2 << 20)


def basic_block_1d(x, w1, g1, b1, w2, g2, b2, *, eps=1e-5):
    """x: (N, Cin, L); w1: (Cout, Cin, K); w2: (Cout, Cout, K); g*/b*: (Cout,)."""
    N, Cin, L = x.shape
    Cout, Cin2, K = w1.shape
    assert Cin == Cin2 and w2.shape == (Cout, Cout, K)
    assert Cin == Cout, "downsample=None requires in_planes == out_planes (stride == 1)"
    assert K % 2 == 1, "identity residual geometry requires odd kernel_size"
    P = K // 2

    # Per-sample stripe width: multiple of 128 (lane-dense), includes the conv halo
    # so the whole block lives in one flat (C, N*Lpad) frame.
    Lpad = ((L + 2 * P + 127) // 128) * 128
    NLp = N * Lpad

    cdtype = x.dtype          # MXU compute dtype (bf16 in -> bf16 operands, f32 acc)
    itemsize = jnp.dtype(cdtype).itemsize

    # Layout plumbing in XLA, outside the kernel: channels-major, per-sample zero
    # halo, batch folded into the lane axis.  x is passed ONCE and also feeds the
    # residual path.
    xt = jnp.transpose(x, (1, 0, 2))                                   # (Cin, N, L)
    xp = jnp.pad(xt, ((0, 0), (0, 0), (P, Lpad - L - P)))              # (Cin, N, Lpad)
    x2 = xp.reshape(Cin, NLp)

    # Validity mask: 1.0 on the real columns [P, P+L) of every stripe.
    col = jnp.arange(Lpad)
    mrow = ((col >= P) & (col < P + L)).astype(jnp.float32)
    mask = jnp.tile(mrow, (N,)).reshape(1, NLp)

    # Per-tap weight matrices: w1t[k] == conv.weight[:, :, k]; cast to compute dtype.
    w1t = jnp.transpose(w1, (2, 0, 1)).astype(cdtype)                  # (K, Cout, Cin)
    w2t = jnp.transpose(w2, (2, 0, 1)).astype(cdtype)                  # (K, Cout, Cout)
    g1c = g1.reshape(Cout, 1).astype(jnp.float32)
    b1c = b1.reshape(Cout, 1).astype(jnp.float32)
    g2c = g2.reshape(Cout, 1).astype(jnp.float32)
    b2c = b2.reshape(Cout, 1).astype(jnp.float32)

    est = _vmem_bytes_estimate(Cin, Cout, NLp, itemsize)
    if est > 48 * 1024 * 1024:
        # TODO(synk): tiled two-phase-BN fallback for working sets beyond ~48 MiB
        #             (needed on v7x's 64 MiB VMEM); raise instead of silently spilling.
        raise ValueError(f"BasicBlock1D working set ~{est >> 20} MiB exceeds the "
                         "VMEM-resident kernel gate; tiled variant required.")
    vmem_limit = int(min(max(est, 32 * 1024 * 1024), 48 * 1024 * 1024))

    vmem = pl.BlockSpec(memory_space=pltpu.MemorySpace.VMEM)
    out2 = pl.pallas_call(
        functools.partial(_basic_block_kernel, inv_cnt=1.0 / float(N * L), eps=eps),
        out_shape=jax.ShapeDtypeStruct((Cout, NLp), x.dtype),
        in_specs=[vmem] * 8,
        out_specs=vmem,
        compiler_params=pltpu.CompilerParams(vmem_limit_bytes=vmem_limit),
    )(x2, mask, w1t, g1c, b1c, w2t, g2c, b2c)

    # Un-pad and return to NCL layout outside the kernel (XLA layout plumbing).
    return jnp.transpose(out2.reshape(Cout, N, Lpad)[:, :, P:P + L], (1, 0, 2))


def _reference_forward(x, w1, g1, b1, w2, g2, b2, eps=1e-5):
    """Pure-JAX reference mirroring the PyTorch forward (training-mode BN)."""
    def conv(h, w):
        p = w.shape[-1] // 2
        return jax.lax.conv_general_dilated(
            h, w, window_strides=(1,), padding=[(p, p)],
            dimension_numbers=("NCH", "OIH", "NCH"),
            precision=jax.lax.Precision.HIGHEST)

    def bn(y, g, b):
        m = jnp.mean(y, axis=(0, 2), keepdims=True)
        v = jnp.mean((y - m) ** 2, axis=(0, 2), keepdims=True)
        return (y - m) / jnp.sqrt(v + eps) * g.reshape(1, -1, 1) + b.reshape(1, -1, 1)

    h = jax.nn.relu(bn(conv(x, w1), g1, b1))
    h = bn(conv(h, w2), g2, b2)
    return jax.nn.relu(h + x)


if __name__ == "__main__":
    # Small shapes consistent with the module: Conv1d over (N, C, L).
    N, C, L, K = 2, 4, 16, 3   # in_planes = out_planes = 4, kernel_size = 3, stride = 1

    key = jax.random.PRNGKey(0)
    kx, k1, k2, kg1, kb1, kg2, kb2 = jax.random.split(key, 7)

    x = jax.random.normal(kx, (N, C, L), dtype=jnp.float32)
    w1 = jax.random.normal(k1, (C, C, K), dtype=jnp.float32) * 0.2   # conv1.weight
    w2 = jax.random.normal(k2, (C, C, K), dtype=jnp.float32) * 0.2   # conv2.weight
    # BatchNorm affine params (PyTorch init is gamma=1, beta=0; perturb for nontrivial test).
    g1 = 1.0 + 0.1 * jax.random.normal(kg1, (C,), dtype=jnp.float32)
    b1 = 0.1 * jax.random.normal(kb1, (C,), dtype=jnp.float32)
    g2 = 1.0 + 0.1 * jax.random.normal(kg2, (C,), dtype=jnp.float32)
    b2 = 0.1 * jax.random.normal(kb2, (C,), dtype=jnp.float32)

    out = basic_block_1d(x, w1, g1, b1, w2, g2, b2)
    out = jax.block_until_ready(out)

    ref = _reference_forward(x, w1, g1, b1, w2, g2, b2)
    assert out.shape == (N, C, L) and out.dtype == x.dtype
    # Tolerance allows for MXU matmul rounding differences vs. the XLA reference path.
    assert jnp.allclose(out, ref, atol=5e-3, rtol=5e-3), "mismatch vs. reference"

    print("KERNEL_OK")
</pallas_src>

<mosaic_0001>
module attributes {stable_mosaic.version = 11 : i64} {
  func.func @_basic_block_kernel(%arg0: memref<4x256xf32, #tpu.memory_space<vmem>>, %arg1: memref<1x256xf32, #tpu.memory_space<vmem>>, %arg2: memref<3x4x4xf32, #tpu.memory_space<vmem>>, %arg3: memref<4x1xf32, #tpu.memory_space<vmem>>, %arg4: memref<4x1xf32, #tpu.memory_space<vmem>>, %arg5: memref<3x4x4xf32, #tpu.memory_space<vmem>>, %arg6: memref<4x1xf32, #tpu.memory_space<vmem>>, %arg7: memref<4x1xf32, #tpu.memory_space<vmem>>, %arg8: memref<4x256xf32, #tpu.memory_space<vmem>>) attributes {dimension_semantics = [], scalar_prefetch = 0 : i64, scratch_operands = 0 : i64, tpu.core_type = #tpu.core_type<tc>} {
    %c0 = arith.constant 0 : index
    %c0_0 = arith.constant 0 : index
    %0 = vector.load %arg1[%c0, %c0_0] : memref<1x256xf32, #tpu.memory_space<vmem>>, vector<1x256xf32>
    %c0_1 = arith.constant 0 : index
    %c0_2 = arith.constant 0 : index
    %1 = vector.load %arg0[%c0_1, %c0_2] : memref<4x256xf32, #tpu.memory_space<vmem>>, vector<4x256xf32>
    %cst = arith.constant 0.000000e+00 : f32
    %2 = vector.broadcast %cst : f32 to vector<4x1xf32>
    %3 = vector.extract_strided_slice %1 {offsets = [0, 0], sizes = [4, 255], strides = [1, 1]} : vector<4x256xf32> to vector<4x255xf32>
    %4 = tpu.concatenate %2, %3 in 1 : vector<4x1xf32>, vector<4x255xf32> -> vector<4x256xf32>
    %c0_3 = arith.constant 0 : index
    %c0_4 = arith.constant 0 : index
    %c0_5 = arith.constant 0 : index
    %5 = vector.load %arg2[%c0_3, %c0_4, %c0_5] : memref<3x4x4xf32, #tpu.memory_space<vmem>>, vector<1x4x4xf32>
    %6 = vector.shape_cast %5 : vector<1x4x4xf32> to vector<4x4xf32>
    %cst_6 = arith.constant dense<0.000000e+00> : vector<4x256xf32>
    %7 = tpu.matmul %6, %4, %cst_6 {dimension_numbers = #tpu.dot_dimension_numbers<[1], [0], [0], [1], [0, 0, 1, 1], [], []>} : vector<4x4xf32>, vector<4x256xf32>, vector<4x256xf32> -> vector<4x256xf32>
    %c1 = arith.constant 1 : index
    %c0_7 = arith.constant 0 : index
    %c0_8 = arith.constant 0 : index
    %8 = vector.load %arg2[%c1, %c0_7, %c0_8] : memref<3x4x4xf32, #tpu.memory_space<vmem>>, vector<1x4x4xf32>
    %9 = vector.shape_cast %8 : vector<1x4x4xf32> to vector<4x4xf32>
    %cst_9 = arith.constant dense<0.000000e+00> : vector<4x256xf32>
    %10 = tpu.matmul %9, %1, %cst_9 {dimension_numbers = #tpu.dot_dimension_numbers<[1], [0], [0], [1], [0, 0, 1, 1], [], []>} : vector<4x4xf32>, vector<4x256xf32>, vector<4x256xf32> -> vector<4x256xf32>
    %11 = arith.addf %7, %10 : vector<4x256xf32>
    %cst_10 = arith.constant 0.000000e+00 : f32
    %12 = vector.broadcast %cst_10 : f32 to vector<4x1xf32>
    %13 = vector.extract_strided_slice %1 {offsets = [0, 1], sizes = [4, 255], strides = [1, 1]} : vector<4x256xf32> to vector<4x255xf32>
    %14 = tpu.concatenate %13, %12 in 1 : vector<4x255xf32>, vector<4x1xf32> -> vector<4x256xf32>
    %c2 = arith.constant 2 : index
    %c0_11 = arith.constant 0 : index
    %c0_12 = arith.constant 0 : index
    %15 = vector.load %arg2[%c2, %c0_11, %c0_12] : memref<3x4x4xf32, #tpu.memory_space<vmem>>, vector<1x4x4xf32>
    %16 = vector.shape_cast %15 : vector<1x4x4xf32> to vector<4x4xf32>
    %cst_13 = arith.constant dense<0.000000e+00> : vector<4x256xf32>
    %17 = tpu.matmul %16, %14, %cst_13 {dimension_numbers = #tpu.dot_dimension_numbers<[1], [0], [0], [1], [0, 0, 1, 1], [], []>} : vector<4x4xf32>, vector<4x256xf32>, vector<4x256xf32> -> vector<4x256xf32>
    %18 = arith.addf %11, %17 : vector<4x256xf32>
    %c0_14 = arith.constant 0 : index
    %c0_15 = arith.constant 0 : index
    %19 = vector.load %arg3[%c0_14, %c0_15] : memref<4x1xf32, #tpu.memory_space<vmem>>, vector<4x1xf32>
    %c0_16 = arith.constant 0 : index
    %c0_17 = arith.constant 0 : index
    %20 = vector.load %arg4[%c0_16, %c0_17] : memref<4x1xf32, #tpu.memory_space<vmem>>, vector<4x1xf32>
    %21 = vector.broadcast %0 : vector<1x256xf32> to vector<4x256xf32>
    %22 = arith.mulf %18, %21 : vector<4x256xf32>
    %cst_18 = arith.constant dense<0.000000e+00> : vector<4xf32>
    %23 = vector.multi_reduction <add>, %22, %cst_18 [1] : vector<4x256xf32> to vector<4xf32>
    %24 = vector.shape_cast %23 : vector<4xf32> to vector<4x1xf32>
    %cst_19 = arith.constant 3.125000e-02 : f32
    %25 = vector.broadcast %cst_19 : f32 to vector<4x1xf32>
    %26 = arith.mulf %24, %25 : vector<4x1xf32>
    %27 = vector.broadcast %26 : vector<4x1xf32> to vector<4x256xf32>
    %28 = arith.subf %18, %27 : vector<4x256xf32>
    %29 = vector.broadcast %0 : vector<1x256xf32> to vector<4x256xf32>
    %30 = arith.mulf %28, %29 : vector<4x256xf32>
    %31 = arith.mulf %30, %30 : vector<4x256xf32>
    %cst_20 = arith.constant dense<0.000000e+00> : vector<4xf32>
    %32 = vector.multi_reduction <add>, %31, %cst_20 [1] : vector<4x256xf32> to vector<4xf32>
    %33 = vector.shape_cast %32 : vector<4xf32> to vector<4x1xf32>
    %cst_21 = arith.constant 3.125000e-02 : f32
    %34 = vector.broadcast %cst_21 : f32 to vector<4x1xf32>
    %35 = arith.mulf %33, %34 : vector<4x1xf32>
    %cst_22 = arith.constant 9.99999974E-6 : f32
    %36 = vector.broadcast %cst_22 : f32 to vector<4x1xf32>
    %37 = arith.addf %35, %36 : vector<4x1xf32>
    %38 = math.rsqrt %37 : vector<4x1xf32>
    %39 = arith.mulf %38, %19 : vector<4x1xf32>
    %40 = vector.broadcast %39 : vector<4x1xf32> to vector<4x256xf32>
    %41 = arith.mulf %30, %40 : vector<4x256xf32>
    %42 = vector.broadcast %20 : vector<4x1xf32> to vector<4x256xf32>
    %43 = arith.addf %41, %42 : vector<4x256xf32>
    %cst_23 = arith.constant 0.000000e+00 : f32
    %44 = vector.broadcast %cst_23 : f32 to vector<4x256xf32>
    %45 = arith.maximumf %43, %44 : vector<4x256xf32>
    %46 = vector.broadcast %0 : vector<1x256xf32> to vector<4x256xf32>
    %47 = arith.mulf %45, %46 : vector<4x256xf32>
    %cst_24 = arith.constant 0.000000e+00 : f32
    %48 = vector.broadcast %cst_24 : f32 to vector<4x1xf32>
    %49 = vector.extract_strided_slice %47 {offsets = [0, 0], sizes = [4, 255], strides = [1, 1]} : vector<4x256xf32> to vector<4x255xf32>
    %50 = tpu.concatenate %48, %49 in 1 : vector<4x1xf32>, vector<4x255xf32> -> vector<4x256xf32>
    %c0_25 = arith.constant 0 : index
    %c0_26 = arith.constant 0 : index
    %c0_27 = arith.constant 0 : index
    %51 = vector.load %arg5[%c0_25, %c0_26, %c0_27] : memref<3x4x4xf32, #tpu.memory_space<vmem>>, vector<1x4x4xf32>
    %52 = vector.shape_cast %51 : vector<1x4x4xf32> to vector<4x4xf32>
    %cst_28 = arith.constant dense<0.000000e+00> : vector<4x256xf32>
    %53 = tpu.matmul %52, %50, %cst_28 {dimension_numbers = #tpu.dot_dimension_numbers<[1], [0], [0], [1], [0, 0, 1, 1], [], []>} : vector<4x4xf32>, vector<4x256xf32>, vector<4x256xf32> -> vector<4x256xf32>
    %c1_29 = arith.constant 1 : index
    %c0_30 = arith.constant 0 : index
    %c0_31 = arith.constant 0 : index
    %54 = vector.load %arg5[%c1_29, %c0_30, %c0_31] : memref<3x4x4xf32, #tpu.memory_space<vmem>>, vector<1x4x4xf32>
    %55 = vector.shape_cast %54 : vector<1x4x4xf32> to vector<4x4xf32>
    %cst_32 = arith.constant dense<0.000000e+00> : vector<4x256xf32>
    %56 = tpu.matmul %55, %47, %cst_32 {dimension_numbers = #tpu.dot_dimension_numbers<[1], [0], [0], [1], [0, 0, 1, 1], [], []>} : vector<4x4xf32>, vector<4x256xf32>, vector<4x256xf32> -> vector<4x256xf32>
    %57 = arith.addf %53, %56 : vector<4x256xf32>
    %cst_33 = arith.constant 0.000000e+00 : f32
    %58 = vector.broadcast %cst_33 : f32 to vector<4x1xf32>
    %59 = vector.extract_strided_slice %47 {offsets = [0, 1], sizes = [4, 255], strides = [1, 1]} : vector<4x256xf32> to vector<4x255xf32>
    %60 = tpu.concatenate %59, %58 in 1 : vector<4x255xf32>, vector<4x1xf32> -> vector<4x256xf32>
    %c2_34 = arith.constant 2 : index
    %c0_35 = arith.constant 0 : index
    %c0_36 = arith.constant 0 : index
    %61 = vector.load %arg5[%c2_34, %c0_35, %c0_36] : memref<3x4x4xf32, #tpu.memory_space<vmem>>, vector<1x4x4xf32>
    %62 = vector.shape_cast %61 : vector<1x4x4xf32> to vector<4x4xf32>
    %cst_37 = arith.constant dense<0.000000e+00> : vector<4x256xf32>
    %63 = tpu.matmul %62, %60, %cst_37 {dimension_numbers = #tpu.dot_dimension_numbers<[1], [0], [0], [1], [0, 0, 1, 1], [], []>} : vector<4x4xf32>, vector<4x256xf32>, vector<4x256xf32> -> vector<4x256xf32>
    %64 = arith.addf %57, %63 : vector<4x256xf32>
    %c0_38 = arith.constant 0 : index
    %c0_39 = arith.constant 0 : index
    %65 = vector.load %arg6[%c0_38, %c0_39] : memref<4x1xf32, #tpu.memory_space<vmem>>, vector<4x1xf32>
    %c0_40 = arith.constant 0 : index
    %c0_41 = arith.constant 0 : index
    %66 = vector.load %arg7[%c0_40, %c0_41] : memref<4x1xf32, #tpu.memory_space<vmem>>, vector<4x1xf32>
    %67 = vector.broadcast %0 : vector<1x256xf32> to vector<4x256xf32>
    %68 = arith.mulf %64, %67 : vector<4x256xf32>
    %cst_42 = arith.constant dense<0.000000e+00> : vector<4xf32>
    %69 = vector.multi_reduction <add>, %68, %cst_42 [1] : vector<4x256xf32> to vector<4xf32>
    %70 = vector.shape_cast %69 : vector<4xf32> to vector<4x1xf32>
    %cst_43 = arith.constant 3.125000e-02 : f32
    %71 = vector.broadcast %cst_43 : f32 to vector<4x1xf32>
    %72 = arith.mulf %70, %71 : vector<4x1xf32>
    %73 = vector.broadcast %72 : vector<4x1xf32> to vector<4x256xf32>
    %74 = arith.subf %64, %73 : vector<4x256xf32>
    %75 = vector.broadcast %0 : vector<1x256xf32> to vector<4x256xf32>
    %76 = arith.mulf %74, %75 : vector<4x256xf32>
    %77 = arith.mulf %76, %76 : vector<4x256xf32>
    %cst_44 = arith.constant dense<0.000000e+00> : vector<4xf32>
    %78 = vector.multi_reduction <add>, %77, %cst_44 [1] : vector<4x256xf32> to vector<4xf32>
    %79 = vector.shape_cast %78 : vector<4xf32> to vector<4x1xf32>
    %cst_45 = arith.constant 3.125000e-02 : f32
    %80 = vector.broadcast %cst_45 : f32 to vector<4x1xf32>
    %81 = arith.mulf %79, %80 : vector<4x1xf32>
    %cst_46 = arith.constant 9.99999974E-6 : f32
    %82 = vector.broadcast %cst_46 : f32 to vector<4x1xf32>
    %83 = arith.addf %81, %82 : vector<4x1xf32>
    %84 = math.rsqrt %83 : vector<4x1xf32>
    %85 = arith.mulf %84, %65 : vector<4x1xf32>
    %86 = vector.broadcast %85 : vector<4x1xf32> to vector<4x256xf32>
    %87 = arith.mulf %76, %86 : vector<4x256xf32>
    %88 = vector.broadcast %66 : vector<4x1xf32> to vector<4x256xf32>
    %89 = arith.addf %87, %88 : vector<4x256xf32>
    %c0_47 = arith.constant 0 : index
    %c0_48 = arith.constant 0 : index
    %90 = vector.load %arg0[%c0_47, %c0_48] : memref<4x256xf32, #tpu.memory_space<vmem>>, vector<4x256xf32>
    %91 = arith.addf %89, %90 : vector<4x256xf32>
    %cst_49 = arith.constant 0.000000e+00 : f32
    %92 = vector.broadcast %cst_49 : f32 to vector<4x256xf32>
    %93 = arith.maximumf %91, %92 : vector<4x256xf32>
    %c0_50 = arith.constant 0 : index
    %c0_51 = arith.constant 0 : index
    %94 = vector.load %arg8[%c0_50, %c0_51] : memref<4x256xf32, #tpu.memory_space<vmem>>, vector<4x256xf32>
    tpu.vector_store %arg8[%c0_50, %c0_51], %93 {strides = array<i32>} : memref<4x256xf32, #tpu.memory_space<vmem>>, vector<4x256xf32>,
    return
  }
}

</mosaic_0001>

<llo_original>
// kernel: tpu_custom_call.1
$region0: #{tpu_custom_call.1}
  #allocation0 [shape = 'u32[]', space=smem, size = 0x4, offset = 0x4, fixed_abs, tag = 'smem constant byte address 0x4 - core index']
  #allocation1 [shape = 'u32[144,128]{1,0:T(1,128)}', space=vmem, size = 0x12000, scoped, tag = 'internal scratch']
  %s0 = inlined_call_operand.hbm [shape: f32[4,256], index: 0, kind: input, shape index: {}]
  %s1 = inlined_call_operand.vmem [shape: f32[1,256], index: 1, kind: input, shape index: {}]
  %s2 = inlined_call_operand.vmem [shape: f32[3,4,4], index: 2, kind: input, shape index: {}]
  %s3 = inlined_call_operand.vmem [shape: f32[4,1], index: 3, kind: input, shape index: {}]
  %s4 = inlined_call_operand.vmem [shape: f32[4,1], index: 4, kind: input, shape index: {}]
  %s5 = inlined_call_operand.vmem [shape: f32[3,4,4], index: 5, kind: input, shape index: {}]
  %s6 = inlined_call_operand.vmem [shape: f32[4,1], index: 6, kind: input, shape index: {}]
  %s7 = inlined_call_operand.vmem [shape: f32[4,1], index: 7, kind: input, shape index: {}]
  %s8 = inlined_call_operand.hbm [shape: f32[4,256], index: 8, kind: output, shape index: {}]
  %s9 = sld [smem:[#allocation0]]
  $region46: #{tpu_custom_call.1} parent=0
    _
  %s11 = ssub.s32 1, %s9
  %s12 = scalar_select 0, %s11, %s9
  $region1: #{tpu_custom_call.1} parent=0
    #allocation2 [shape = 'u8[4096]{0}', space=vmem, size = 0x1000, scoped, tag = 'input window, operand 0, single buffered']
    #allocation3 [shape = 's32[1]{0}', space=sflag, size = 0x4, scoped, tag = 'scoped memory for tpu_custom_call.1']
    #allocation4 [shape = 's32[1]{0}', space=sflag, size = 0x4, scoped, tag = 'scoped memory for tpu_custom_call.1']
    #allocation5 [shape = 'u8[4096]{0}', space=vmem, size = 0x1000, scoped, tag = 'output window, operand 0, single buffered']
    %13 = vsyncpa [#allocation3], 0
    %14 = vsyncpa [#allocation4], 0
    // Predicated region
    $region2: #{tpu_custom_call.1} parent=1 // pred_check
      _
    $region3: #{tpu_custom_call.1} parent=1 // pred_check_branch
      %16 = sbr.rel (0) target = $region5
    $region4: #{tpu_custom_call.1} parent=1 // pred_region
      %s18 = ssub.s32 128, 128
      %19 = vsyncadd [#allocation3], %s18
      %s21 = sshll.u32 [#allocation2], 4
      %s22 = int_to_ptr.vmem [resolvable:$true] %s21
      %24 = dma.hbm_to_vmem [thread:$0]  %s0, 128, %s22, [#allocation3]
    $region5: #{tpu_custom_call.1} parent=1 // pred_fallthru
      _
    // Predicated region
    $region6: #{tpu_custom_call.1} parent=1 // pred_check
      _
    $region7: #{tpu_custom_call.1} parent=1 // pred_check_branch
      %26 = sbr.rel (0) target = $region9
    $region8: #{tpu_custom_call.1} parent=1 // pred_region
      _
    $region9: #{tpu_custom_call.1} parent=1 // pred_fallthru
      _
    // Predicated region
    $region10: #{tpu_custom_call.1} parent=1 // pred_check
      _
    $region11: #{tpu_custom_call.1} parent=1 // pred_check_branch
      %28 = sbr.rel (0) target = $region13
    $region12: #{tpu_custom_call.1} parent=1 // pred_region
      _
    $region13: #{tpu_custom_call.1} parent=1 // pred_fallthru
      _
    // Predicated region
    $region14: #{tpu_custom_call.1} parent=1 // pred_check
      _
    $region15: #{tpu_custom_call.1} parent=1 // pred_check_branch
      %30 = sbr.rel (0) target = $region17
    $region16: #{tpu_custom_call.1} parent=1 // pred_region
      _
    $region17: #{tpu_custom_call.1} parent=1 // pred_fallthru
      _
    // Predicated region
    $region18: #{tpu_custom_call.1} parent=1 // pred_check
      _
    $region19: #{tpu_custom_call.1} parent=1 // pred_check_branch
      %32 = sbr.rel (0) target = $region21
    $region20: #{tpu_custom_call.1} parent=1 // pred_region
      _
    $region21: #{tpu_custom_call.1} parent=1 // pred_fallthru
      _
    // Predicated region
    $region22: #{tpu_custom_call.1} parent=1 // pred_check
      _
    $region23: #{tpu_custom_call.1} parent=1 // pred_check_branch
      %34 = sbr.rel (0) target = $region25
    $region24: #{tpu_custom_call.1} parent=1 // pred_region
      _
    $region25: #{tpu_custom_call.1} parent=1 // pred_fallthru
      _
    // Predicated region
    $region26: #{tpu_custom_call.1} parent=1 // pred_check
      _
    $region27: #{tpu_custom_call.1} parent=1 // pred_check_branch
      %36 = sbr.rel (0) target = $region29
    $region28: #{tpu_custom_call.1} parent=1 // pred_region
      _
    $region29: #{tpu_custom_call.1} parent=1 // pred_fallthru
      _
    // Predicated region
    $region30: #{tpu_custom_call.1} parent=1 // pred_check
      _
    $region31: #{tpu_custom_call.1} parent=1 // pred_check_branch
      %38 = sbr.rel (0) target = $region33
    $region32: #{tpu_custom_call.1} parent=1 // pred_region
      _
    $region33: #{tpu_custom_call.1} parent=1 // pred_fallthru
      _
    // Predicated region
    $region34: #{tpu_custom_call.1} parent=1 // pred_check
      _
    $region35: #{tpu_custom_call.1} parent=1 // pred_check_branch
      %40 = sbr.rel (0) target = $region37
    $region36: #{tpu_custom_call.1} parent=1 // pred_region
      %41 = dma.done [#allocation3], 128
    $region37: #{tpu_custom_call.1} parent=1 // pred_fallthru
      _
    %v42 = vld [vmem:[%s1] sm:$0x3]
    %v43 = vld [vmem:[#allocation2] sm:$0xff]
    %v45 = vcombine.high %v43, %v43
    %46 = vrot.lane.b32.xlu0 %v43, 1
    %v47 = vpop.permute.xlu0 %46
    %48 = vrot.lane.b32.xlu0 %v45, 1
    %v49 = vpop.permute.xlu0 %48
    %vm50 = vcmask 7168
    %v51 = vsel %vm50, %v47, %v49
    %v53 = vsel %vm50, 0.0, %v47
    %v54 = vld [vmem:[%s2] sm:$0xf]
    %s55 = scalar_lea.vmem %s2, 4
    %v56 = vld [vmem:[%s55] sm:$0xf]
    %vm57 = vcmask 31744
    %v59 = vsel %vm57, %v56, 0
    %vm61 = vcmask 1043456
    %v62 = vsel %vm61, %v43, 0
    %v64 = vsel %vm61, %v45, 0
    %66 = vmatprep.subr.mxu0 %v64
    %67 = vmatpush1.msra.mxu0 %v62
    %68 = vmatprep.subr.mxu0 0.0
    %69 = vmatpush1.msra.mxu0 0.0
    %70 = vmatprep.subr.mxu0 0.0
    %71 = vmatpush1.msra.mxu0 0.0
    %72 = vmatprep.subr.mxu0 0.0
    %73 = vmatpush1.msra.mxu0 0.0
    %74 = vmatprep.subr.mxu0 0.0
    %75 = vmatpush1.msra.mxu0 0.0
    %76 = vmatprep.subr.mxu0 0.0
    %77 = vmatpush1.msra.mxu0 0.0
    %78 = vmatprep.subr.mxu0 0.0
    %79 = vmatpush1.msra.mxu0 0.0
    %80 = vmatprep.subr.mxu0 0.0
    %81 = vmatpush1.msra.mxu0 0.0
    %82 = vmatprep.subr.mxu0 0.0
    %83 = vmatpush1.msra.mxu0 0.0
    %84 = vmatprep.subr.mxu0 0.0
    %85 = vmatpush1.msra.mxu0 0.0
    %86 = vmatprep.subr.mxu0 0.0
    %87 = vmatpush1.msra.mxu0 0.0
    %88 = vmatprep.subr.mxu0 0.0
    %89 = vmatpush1.msra.mxu0 0.0
    %90 = vmatprep.subr.mxu0 0.0
    %91 = vmatpush1.msra.mxu0 0.0
    %92 = vmatprep.subr.mxu0 0.0
    %93 = vmatpush1.msra.mxu0 0.0
    %94 = vmatprep.subr.mxu0 0.0
    %95 = vmatpush1.msra.mxu0 0.0
    %96 = vmatprep.subr.mxu0 0.0
    %97 = vmatpush1.msra.mxu0 0.0
    %98 = vmatprep.subr.mxu0 0.0
    %99 = vmatpush1.msra.mxu0 0.0
    %100 = vmatprep.subr.mxu0 0.0
    %101 = vmatpush1.msra.mxu0 0.0
    %102 = vmatprep.subr.mxu0 0.0
    %103 = vmatpush1.msra.mxu0 0.0
    %104 = vmatprep.subr.mxu0 0.0
    %105 = vmatpush1.msra.mxu0 0.0
    %106 = vmatprep.subr.mxu0 0.0
    %107 = vmatpush1.msra.mxu0 0.0
    %108 = vmatprep.subr.mxu0 0.0
    %109 = vmatpush1.msra.mxu0 0.0
    %110 = vmatprep.subr.mxu0 0.0
    %111 = vmatpush1.msra.mxu0 0.0
    %112 = vmatprep.subr.mxu0 0.0
    %113 = vmatpush1.msra.mxu0 0.0
    %114 = vmatprep.subr.mxu0 0.0
    %115 = vmatpush1.msra.mxu0 0.0
    %116 = vmatprep.subr.mxu0 0.0
    %117 = vmatpush1.msra.mxu0 0.0
    %118 = vmatprep.subr.mxu0 0.0
    %119 = vmatpush1.msra.mxu0 0.0
    %120 = vmatprep.subr.mxu0 0.0
    %121 = vmatpush1.msra.mxu0 0.0
    %122 = vmatprep.subr.mxu0 0.0
    %123 = vmatpush1.msra.mxu0 0.0
    %124 = vmatprep.subr.mxu0 0.0
    %125 = vmatpush1.msra.mxu0 0.0
    %126 = vmatprep.subr.mxu0 0.0
    %127 = vmatpush1.msra.mxu0 0.0
    %128 = vmatprep.subr.mxu0 0.0
    %129 = vmatpush1.msra.mxu0 0.0
    %130 = vmatprep.mubr.f32.mxu0 0.0
    %131 = vmatmul.mubr.f32.gmra.mrb[0].mxu0 %v59
    %v132 = vpop.f32.mrb[0].mxu0
    %v133 = vadd.f32 0.0, %v132
    %v134 = vpop.f32.mrb[0].mxu0
    %v135 = vadd.f32 0.0, %v134
    %136 = vdwg.mxu0
    %v138 = vsel %vm57, %v54, 0
    %v141 = vsel %vm61, %v53, 0
    %v143 = vsel %vm61, %v51, 0
    %145 = vmatprep.subr.mxu0 %v143
    %146 = vmatpush1.msra.mxu0 %v141
    %147 = vmatprep.subr.mxu0 0.0
    %148 = vmatpush1.msra.mxu0 0.0
    %149 = vmatprep.subr.mxu0 0.0
    %150 = vmatpush1.msra.mxu0 0.0
    %151 = vmatprep.subr.mxu0 0.0
    %152 = vmatpush1.msra.mxu0 0.0
    %153 = vmatprep.subr.mxu0 0.0
    %154 = vmatpush1.msra.mxu0 0.0
    %155 = vmatprep.subr.mxu0 0.0
    %156 = vmatpush1.msra.mxu0 0.0
    %157 = vmatprep.subr.mxu0 0.0
    %158 = vmatpush1.msra.mxu0 0.0
    %159 = vmatprep.subr.mxu0 0.0
    %160 = vmatpush1.msra.mxu0 0.0
    %161 = vmatprep.subr.mxu0 0.0
    %162 = vmatpush1.msra.mxu0 0.0
    %163 = vmatprep.subr.mxu0 0.0
    %164 = vmatpush1.msra.mxu0 0.0
    %165 = vmatprep.subr.mxu0 0.0
    %166 = vmatpush1.msra.mxu0 0.0
    %167 = vmatprep.subr.mxu0 0.0
    %168 = vmatpush1.msra.mxu0 0.0
    %169 = vmatprep.subr.mxu0 0.0
    %170 = vmatpush1.msra.mxu0 0.0
    %171 = vmatprep.subr.mxu0 0.0
    %172 = vmatpush1.msra.mxu0 0.0
    %173 = vmatprep.subr.mxu0 0.0
    %174 = vmatpush1.msra.mxu0 0.0
    %175 = vmatprep.subr.mxu0 0.0
    %176 = vmatpush1.msra.mxu0 0.0
    %177 = vmatprep.subr.mxu0 0.0
    %178 = vmatpush1.msra.mxu0 0.0
    %179 = vmatprep.subr.mxu0 0.0
    %180 = vmatpush1.msra.mxu0 0.0
    %181 = vmatprep.subr.mxu0 0.0
    %182 = vmatpush1.msra.mxu0 0.0
    %183 = vmatprep.subr.mxu0 0.0
    %184 = vmatpush1.msra.mxu0 0.0
    %185 = vmatprep.subr.mxu0 0.0
    %186 = vmatpush1.msra.mxu0 0.0
    %187 = vmatprep.subr.mxu0 0.0
    %188 = vmatpush1.msra.mxu0 0.0
    %189 = vmatprep.subr.mxu0 0.0
    %190 = vmatpush1.msra.mxu0 0.0
    %191 = vmatprep.subr.mxu0 0.0
    %192 = vmatpush1.msra.mxu0 0.0
    %193 = vmatprep.subr.mxu0 0.0
    %194 = vmatpush1.msra.mxu0 0.0
    %195 = vmatprep.subr.mxu0 0.0
    %196 = vmatpush1.msra.mxu0 0.0
    %197 = vmatprep.subr.mxu0 0.0
    %198 = vmatpush1.msra.mxu0 0.0
    %199 = vmatprep.subr.mxu0 0.0
    %200 = vmatpush1.msra.mxu0 0.0
    %201 = vmatprep.subr.mxu0 0.0
    %202 = vmatpush1.msra.mxu0 0.0
    %203 = vmatprep.subr.mxu0 0.0
    %204 = vmatpush1.msra.mxu0 0.0
    %205 = vmatprep.subr.mxu0 0.0
    %206 = vmatpush1.msra.mxu0 0.0
    %207 = vmatprep.subr.mxu0 0.0
    %208 = vmatpush1.msra.mxu0 0.0
    %209 = vmatprep.mubr.f32.mxu0 0.0
    %210 = vmatmul.mubr.f32.gmra.mrb[0].mxu0 %v138
    %v211 = vpop.f32.mrb[0].mxu0
    %v212 = vadd.f32 %v133, %v211
    %v213 = vpop.f32.mrb[0].mxu0
    %v214 = vadd.f32 %v135, %v213
    %215 = vdwg.mxu0
    %216 = vrot.lane.b32.xlu0 %v43, 127
    %v217 = vpop.permute.xlu0 %216
    %218 = vrot.lane.b32.xlu0 %v45, 127
    %v219 = vpop.permute.xlu0 %218
    %vm220 = vcmask 1039360
    %v221 = vsel %vm220, %v217, %v219
    %v223 = vsel %vm220, %v219, 0.0
    %s224 = scalar_lea.vmem %s2, 8
    %v225 = vld [vmem:[%s224] sm:$0xf]
    %v227 = vsel %vm57, %v225, 0
    %v229 = vsel %vm61, %v221, 0
    %v232 = vsel %vm61, %v223, 0
    %234 = vmatprep.subr.mxu0 %v232
    %235 = vmatpush1.msra.mxu0 %v229
    %236 = vmatprep.subr.mxu0 0.0
    %237 = vmatpush1.msra.mxu0 0.0
    %238 = vmatprep.subr.mxu0 0.0
    %239 = vmatpush1.msra.mxu0 0.0
    %240 = vmatprep.subr.mxu0 0.0
    %241 = vmatpush1.msra.mxu0 0.0
    %242 = vmatprep.subr.mxu0 0.0
    %243 = vmatpush1.msra.mxu0 0.0
    %244 = vmatprep.subr.mxu0 0.0
    %245 = vmatpush1.msra.mxu0 0.0
    %246 = vmatprep.subr.mxu0 0.0
    %247 = vmatpush1.msra.mxu0 0.0
    %248 = vmatprep.subr.mxu0 0.0
    %249 = vmatpush1.msra.mxu0 0.0
    %250 = vmatprep.subr.mxu0 0.0
    %251 = vmatpush1.msra.mxu0 0.0
    %252 = vmatprep.subr.mxu0 0.0
    %253 = vmatpush1.msra.mxu0 0.0
    %254 = vmatprep.subr.mxu0 0.0
    %255 = vmatpush1.msra.mxu0 0.0
    %256 = vmatprep.subr.mxu0 0.0
    %257 = vmatpush1.msra.mxu0 0.0
    %258 = vmatprep.subr.mxu0 0.0
    %259 = vmatpush1.msra.mxu0 0.0
    %260 = vmatprep.subr.mxu0 0.0
    %261 = vmatpush1.msra.mxu0 0.0
    %262 = vmatprep.subr.mxu0 0.0
    %263 = vmatpush1.msra.mxu0 0.0
    %264 = vmatprep.subr.mxu0 0.0
    %265 = vmatpush1.msra.mxu0 0.0
    %266 = vmatprep.subr.mxu0 0.0
    %267 = vmatpush1.msra.mxu0 0.0
    %268 = vmatprep.subr.mxu0 0.0
    %269 = vmatpush1.msra.mxu0 0.0
    %270 = vmatprep.subr.mxu0 0.0
    %271 = vmatpush1.msra.mxu0 0.0
    %272 = vmatprep.subr.mxu0 0.0
    %273 = vmatpush1.msra.mxu0 0.0
    %274 = vmatprep.subr.mxu0 0.0
    %275 = vmatpush1.msra.mxu0 0.0
    %276 = vmatprep.subr.mxu0 0.0
    %277 = vmatpush1.msra.mxu0 0.0
    %278 = vmatprep.subr.mxu0 0.0
    %279 = vmatpush1.msra.mxu0 0.0
    %280 = vmatprep.subr.mxu0 0.0
    %281 = vmatpush1.msra.mxu0 0.0
    %282 = vmatprep.subr.mxu0 0.0
    %283 = vmatpush1.msra.mxu0 0.0
    %284 = vmatprep.subr.mxu0 0.0
    %285 = vmatpush1.msra.mxu0 0.0
    %286 = vmatprep.subr.mxu0 0.0
    %287 = vmatpush1.msra.mxu0 0.0
    %288 = vmatprep.subr.mxu0 0.0
    %289 = vmatpush1.msra.mxu0 0.0
    %290 = vmatprep.subr.mxu0 0.0
    %291 = vmatpush1.msra.mxu0 0.0
    %292 = vmatprep.subr.mxu0 0.0
    %293 = vmatpush1.msra.mxu0 0.0
    %294 = vmatprep.subr.mxu0 0.0
    %295 = vmatpush1.msra.mxu0 0.0
    %296 = vmatprep.subr.mxu0 0.0
    %297 = vmatpush1.msra.mxu0 0.0
    %298 = vmatprep.mubr.f32.mxu0 0.0
    %299 = vmatmul.mubr.f32.gmra.mrb[0].mxu0 %v227
    %v300 = vpop.f32.mrb[0].mxu0
    %v301 = vadd.f32 0.0, %v300
    %v302 = vpop.f32.mrb[0].mxu0
    %v303 = vadd.f32 0.0, %v302
    %304 = vdwg.mxu0
    %v305 = vadd.f32 %v212, %v301
    %v306 = vadd.f32 %v214, %v303
    %v307 = vld [vmem:[%s3] sm:$0xf]
    %v308 = vld [vmem:[%s4] sm:$0xf]
    %v310 = vlaneseq
    %v311 = vshrl.u32 %v310, 7
    %v312 = vsub.s32 0, %v311
    %v313 = vrot.slane %v42, %v312
    %v314 = vlaneseq
    %v315 = vshrl.u32 %v314, 7
    %v316 = vsub.s32 1, %v315
    %v317 = vrot.slane %v42, %v316
    %v320 = vmul.f32 %v305, %v313
    %v321 = vmul.f32 %v306, %v317
    %v322 = vsel %vm61, %v320, 0.0
    %v323 = vsel %vm61, %v321, 0.0
    %v324 = vadd.f32 %v322, %v323
    %325 = vadd.xlane.f32.xlu0 %v324
    %v326 = vpop.xlane.xlu0 %325
    %v327 = vmul.f32 %v326, 0.03125
    %v328 = vsub.f32 %v305, %v327
    %v329 = vsub.f32 %v306, %v327
    %v330 = vmul.f32 %v328, %v313
    %v331 = vmul.f32 %v329, %v317
    %v332 = vmul.f32 %v330, %v330
    %v333 = vmul.f32 %v331, %v331
    %v334 = vsel %vm61, %v332, 0.0
    %v335 = vsel %vm61, %v333, 0.0
    %v336 = vadd.f32 %v334, %v335
    %337 = vadd.xlane.f32.xlu0 %v336
    %v338 = vpop.xlane.xlu0 %337
    %v339 = vmul.f32 %v338, 0.03125
    %v340 = vadd.f32 %v339, 1e-05
    %v341 = vrsqrt.pop %v340
    %v342 = vmul.f32 %v341, %v307
    %344 = vset.pattern.permute.xlu0 0
    %345 = vperm.xlu0 %344, %v342
    %v346 = vpop.permute.xlu0 %345
    %v348 = vmul.f32 %v330, %v346
    %v349 = vmul.f32 %v331, %v346
    %351 = vset.pattern.permute.xlu0 0
    %352 = vperm.xlu0 %351, %v308
    %v353 = vpop.permute.xlu0 %352
    %v355 = vadd.f32 %v348, %v353
    %v356 = vadd.f32 %v349, %v353
    %v357 = vmax.f32 %v355, 0.0
    %v358 = vmax.f32 %v356, 0.0
    %v359 = vmul.f32 %v357, %v313
    %v360 = vmul.f32 %v358, %v317
    %363 = vrot.lane.b32.xlu0 %v359, 1
    %v364 = vpop.permute.xlu0 %363
    %365 = vrot.lane.b32.xlu0 %v360, 1
    %v366 = vpop.permute.xlu0 %365
    %v367 = vsel %vm50, %v364, %v366
    %v369 = vsel %vm50, 0.0, %v364
    %v370 = vld [vmem:[%s5] sm:$0xf]
    %s371 = scalar_lea.vmem %s5, 4
    %v372 = vld [vmem:[%s371] sm:$0xf]
    %v374 = vsel %vm57, %v372, 0
    %v376 = vsel %vm61, %v359, 0
    %v378 = vsel %vm61, %v360, 0
    %380 = vmatprep.subr.mxu0 %v378
    %381 = vmatpush1.msra.mxu0 %v376
    %382 = vmatprep.subr.mxu0 0.0
    %383 = vmatpush1.msra.mxu0 0.0
    %384 = vmatprep.subr.mxu0 0.0
    %385 = vmatpush1.msra.mxu0 0.0
    %386 = vmatprep.subr.mxu0 0.0
    %387 = vmatpush1.msra.mxu0 0.0
    %388 = vmatprep.subr.mxu0 0.0
    %389 = vmatpush1.msra.mxu0 0.0
    %390 = vmatprep.subr.mxu0 0.0
    %391 = vmatpush1.msra.mxu0 0.0
    %392 = vmatprep.subr.mxu0 0.0
    %393 = vmatpush1.msra.mxu0 0.0
    %394 = vmatprep.subr.mxu0 0.0
    %395 = vmatpush1.msra.mxu0 0.0
    %396 = vmatprep.subr.mxu0 0.0
    %397 = vmatpush1.msra.mxu0 0.0
    %398 = vmatprep.subr.mxu0 0.0
    %399 = vmatpush1.msra.mxu0 0.0
    %400 = vmatprep.subr.mxu0 0.0
    %401 = vmatpush1.msra.mxu0 0.0
    %402 = vmatprep.subr.mxu0 0.0
    %403 = vmatpush1.msra.mxu0 0.0
    %404 = vmatprep.subr.mxu0 0.0
    %405 = vmatpush1.msra.mxu0 0.0
    %406 = vmatprep.subr.mxu0 0.0
    %407 = vmatpush1.msra.mxu0 0.0
    %408 = vmatprep.subr.mxu0 0.0
    %409 = vmatpush1.msra.mxu0 0.0
    %410 = vmatprep.subr.mxu0 0.0
    %411 = vmatpush1.msra.mxu0 0.0
    %412 = vmatprep.subr.mxu0 0.0
    %413 = vmatpush1.msra.mxu0 0.0
    %414 = vmatprep.subr.mxu0 0.0
    %415 = vmatpush1.msra.mxu0 0.0
    %416 = vmatprep.subr.mxu0 0.0
    %417 = vmatpush1.msra.mxu0 0.0
    %418 = vmatprep.subr.mxu0 0.0
    %419 = vmatpush1.msra.mxu0 0.0
    %420 = vmatprep.subr.mxu0 0.0
    %421 = vmatpush1.msra.mxu0 0.0
    %422 = vmatprep.subr.mxu0 0.0
    %423 = vmatpush1.msra.mxu0 0.0
    %424 = vmatprep.subr.mxu0 0.0
    %425 = vmatpush1.msra.mxu0 0.0
    %426 = vmatprep.subr.mxu0 0.0
    %427 = vmatpush1.msra.mxu0 0.0
    %428 = vmatprep.subr.mxu0 0.0
    %429 = vmatpush1.msra.mxu0 0.0
    %430 = vmatprep.subr.mxu0 0.0
    %431 = vmatpush1.msra.mxu0 0.0
    %432 = vmatprep.subr.mxu0 0.0
    %433 = vmatpush1.msra.mxu0 0.0
    %434 = vmatprep.subr.mxu0 0.0
    %435 = vmatpush1.msra.mxu0 0.0
    %436 = vmatprep.subr.mxu0 0.0
    %437 = vmatpush1.msra.mxu0 0.0
    %438 = vmatprep.subr.mxu0 0.0
    %439 = vmatpush1.msra.mxu0 0.0
    %440 = vmatprep.subr.mxu0 0.0
    %441 = vmatpush1.msra.mxu0 0.0
    %442 = vmatprep.subr.mxu0 0.0
    %443 = vmatpush1.msra.mxu0 0.0
    %444 = vmatprep.mubr.f32.mxu0 0.0
    %445 = vmatmul.mubr.f32.gmra.mrb[0].mxu0 %v374
    %v446 = vpop.f32.mrb[0].mxu0
    %v447 = vadd.f32 0.0, %v446
    %v448 = vpop.f32.mrb[0].mxu0
    %v449 = vadd.f32 0.0, %v448
    %450 = vdwg.mxu0
    %v452 = vsel %vm57, %v370, 0
    %v455 = vsel %vm61, %v369, 0
    %v457 = vsel %vm61, %v367, 0
    %459 = vmatprep.subr.mxu0 %v457
    %460 = vmatpush1.msra.mxu0 %v455
    %461 = vmatprep.subr.mxu0 0.0
    %462 = vmatpush1.msra.mxu0 0.0
    %463 = vmatprep.subr.mxu0 0.0
    %464 = vmatpush1.msra.mxu0 0.0
    %465 = vmatprep.subr.mxu0 0.0
    %466 = vmatpush1.msra.mxu0 0.0
    %467 = vmatprep.subr.mxu0 0.0
    %468 = vmatpush1.msra.mxu0 0.0
    %469 = vmatprep.subr.mxu0 0.0
    %470 = vmatpush1.msra.mxu0 0.0
    %471 = vmatprep.subr.mxu0 0.0
    %472 = vmatpush1.msra.mxu0 0.0
    %473 = vmatprep.subr.mxu0 0.0
    %474 = vmatpush1.msra.mxu0 0.0
    %475 = vmatprep.subr.mxu0 0.0
    %476 = vmatpush1.msra.mxu0 0.0
    %477 = vmatprep.subr.mxu0 0.0
    %478 = vmatpush1.msra.mxu0 0.0
    %479 = vmatprep.subr.mxu0 0.0
    %480 = vmatpush1.msra.mxu0 0.0
    %481 = vmatprep.subr.mxu0 0.0
    %482 = vmatpush1.msra.mxu0 0.0
    %483 = vmatprep.subr.mxu0 0.0
    %484 = vmatpush1.msra.mxu0 0.0
    %485 = vmatprep.subr.mxu0 0.0
    %486 = vmatpush1.msra.mxu0 0.0
    %487 = vmatprep.subr.mxu0 0.0
    %488 = vmatpush1.msra.mxu0 0.0
    %489 = vmatprep.subr.mxu0 0.0
    %490 = vmatpush1.msra.mxu0 0.0
    %491 = vmatprep.subr.mxu0 0.0
    %492 = vmatpush1.msra.mxu0 0.0
    %493 = vmatprep.subr.mxu0 0.0
    %494 = vmatpush1.msra.mxu0 0.0
    %495 = vmatprep.subr.mxu0 0.0
    %496 = vmatpush1.msra.mxu0 0.0
    %497 = vmatprep.subr.mxu0 0.0
    %498 = vmatpush1.msra.mxu0 0.0
    %499 = vmatprep.subr.mxu0 0.0
    %500 = vmatpush1.msra.mxu0 0.0
    %501 = vmatprep.subr.mxu0 0.0
    %502 = vmatpush1.msra.mxu0 0.0
    %503 = vmatprep.subr.mxu0 0.0
    %504 = vmatpush1.msra.mxu0 0.0
    %505 = vmatprep.subr.mxu0 0.0
    %506 = vmatpush1.msra.mxu0 0.0
    %507 = vmatprep.subr.mxu0 0.0
    %508 = vmatpush1.msra.mxu0 0.0
    %509 = vmatprep.subr.mxu0 0.0
    %510 = vmatpush1.msra.mxu0 0.0
    %511 = vmatprep.subr.mxu0 0.0
    %512 = vmatpush1.msra.mxu0 0.0
    %513 = vmatprep.subr.mxu0 0.0
    %514 = vmatpush1.msra.mxu0 0.0
    %515 = vmatprep.subr.mxu0 0.0
    %516 = vmatpush1.msra.mxu0 0.0
    %517 = vmatprep.subr.mxu0 0.0
    %518 = vmatpush1.msra.mxu0 0.0
    %519 = vmatprep.subr.mxu0 0.0
    %520 = vmatpush1.msra.mxu0 0.0
    %521 = vmatprep.subr.mxu0 0.0
    %522 = vmatpush1.msra.mxu0 0.0
    %523 = vmatprep.mubr.f32.mxu0 0.0
    %524 = vmatmul.mubr.f32.gmra.mrb[0].mxu0 %v452
    %v525 = vpop.f32.mrb[0].mxu0
    %v526 = vadd.f32 %v447, %v525
    %v527 = vpop.f32.mrb[0].mxu0
    %v528 = vadd.f32 %v449, %v527
    %529 = vdwg.mxu0
    %530 = vrot.lane.b32.xlu0 %v359, 127
    %v531 = vpop.permute.xlu0 %530
    %532 = vrot.lane.b32.xlu0 %v360, 127
    %v533 = vpop.permute.xlu0 %532
    %v534 = vsel %vm220, %v531, %v533
    %v536 = vsel %vm220, %v533, 0.0
    %s537 = scalar_lea.vmem %s5, 8
    %v538 = vld [vmem:[%s537] sm:$0xf]
    %v540 = vsel %vm57, %v538, 0
    %v542 = vsel %vm61, %v534, 0
    %v545 = vsel %vm61, %v536, 0
    %547 = vmatprep.subr.mxu0 %v545
    %548 = vmatpush1.msra.mxu0 %v542
    %549 = vmatprep.subr.mxu0 0.0
    %550 = vmatpush1.msra.mxu0 0.0
    %551 = vmatprep.subr.mxu0 0.0
    %552 = vmatpush1.msra.mxu0 0.0
    %553 = vmatprep.subr.mxu0 0.0
    %554 = vmatpush1.msra.mxu0 0.0
    %555 = vmatprep.subr.mxu0 0.0
    %556 = vmatpush1.msra.mxu0 0.0
    %557 = vmatprep.subr.mxu0 0.0
    %558 = vmatpush1.msra.mxu0 0.0
    %559 = vmatprep.subr.mxu0 0.0
    %560 = vmatpush1.msra.mxu0 0.0
    %561 = vmatprep.subr.mxu0 0.0
    %562 = vmatpush1.msra.mxu0 0.0
    %563 = vmatprep.subr.mxu0 0.0
    %564 = vmatpush1.msra.mxu0 0.0
    %565 = vmatprep.subr.mxu0 0.0
    %566 = vmatpush1.msra.mxu0 0.0
    %567 = vmatprep.subr.mxu0 0.0
    %568 = vmatpush1.msra.mxu0 0.0
    %569 = vmatprep.subr.mxu0 0.0
    %570 = vmatpush1.msra.mxu0 0.0
    %571 = vmatprep.subr.mxu0 0.0
    %572 = vmatpush1.msra.mxu0 0.0
    %573 = vmatprep.subr.mxu0 0.0
    %574 = vmatpush1.msra.mxu0 0.0
    %575 = vmatprep.subr.mxu0 0.0
    %576 = vmatpush1.msra.mxu0 0.0
    %577 = vmatprep.subr.mxu0 0.0
    %578 = vmatpush1.msra.mxu0 0.0
    %579 = vmatprep.subr.mxu0 0.0
    %580 = vmatpush1.msra.mxu0 0.0
    %581 = vmatprep.subr.mxu0 0.0
    %582 = vmatpush1.msra.mxu0 0.0
    %583 = vmatprep.subr.mxu0 0.0
    %584 = vmatpush1.msra.mxu0 0.0
    %585 = vmatprep.subr.mxu0 0.0
    %586 = vmatpush1.msra.mxu0 0.0
    %587 = vmatprep.subr.mxu0 0.0
    %588 = vmatpush1.msra.mxu0 0.0
    %589 = vmatprep.subr.mxu0 0.0
    %590 = vmatpush1.msra.mxu0 0.0
    %591 = vmatprep.subr.mxu0 0.0
    %592 = vmatpush1.msra.mxu0 0.0
    %593 = vmatprep.subr.mxu0 0.0
    %594 = vmatpush1.msra.mxu0 0.0
    %595 = vmatprep.subr.mxu0 0.0
    %596 = vmatpush1.msra.mxu0 0.0
    %597 = vmatprep.subr.mxu0 0.0
    %598 = vmatpush1.msra.mxu0 0.0
    %599 = vmatprep.subr.mxu0 0.0
    %600 = vmatpush1.msra.mxu0 0.0
    %601 = vmatprep.subr.mxu0 0.0
    %602 = vmatpush1.msra.mxu0 0.0
    %603 = vmatprep.subr.mxu0 0.0
    %604 = vmatpush1.msra.mxu0 0.0
    %605 = vmatprep.subr.mxu0 0.0
    %606 = vmatpush1.msra.mxu0 0.0
    %607 = vmatprep.subr.mxu0 0.0
    %608 = vmatpush1.msra.mxu0 0.0
    %609 = vmatprep.subr.mxu0 0.0
    %610 = vmatpush1.msra.mxu0 0.0
    %611 = vmatprep.mubr.f32.mxu0 0.0
    %612 = vmatmul.mubr.f32.gmra.mrb[0].mxu0 %v540
    %v613 = vpop.f32.mrb[0].mxu0
    %v614 = vadd.f32 0.0, %v613
    %v615 = vpop.f32.mrb[0].mxu0
    %v616 = vadd.f32 0.0, %v615
    %617 = vdwg.mxu0
    %v618 = vadd.f32 %v526, %v614
    %v619 = vadd.f32 %v528, %v616
    %v620 = vld [vmem:[%s6] sm:$0xf]
    %v621 = vld [vmem:[%s7] sm:$0xf]
    %v622 = vmul.f32 %v618, %v313
    %v623 = vmul.f32 %v619, %v317
    %v624 = vsel %vm61, %v622, 0.0
    %v625 = vsel %vm61, %v623, 0.0
    %v626 = vadd.f32 %v624, %v625
    %627 = vadd.xlane.f32.xlu0 %v626
    %v628 = vpop.xlane.xlu0 %627
    %v629 = vmul.f32 %v628, 0.03125
    %v630 = vsub.f32 %v618, %v629
    %v631 = vsub.f32 %v619, %v629
    %v632 = vmul.f32 %v630, %v313
    %v633 = vmul.f32 %v631, %v317
    %v634 = vmul.f32 %v632, %v632
    %v635 = vmul.f32 %v633, %v633
    %v636 = vsel %vm61, %v634, 0.0
    %v637 = vsel %vm61, %v635, 0.0
    %v638 = vadd.f32 %v636, %v637
    %639 = vadd.xlane.f32.xlu0 %v638
    %v640 = vpop.xlane.xlu0 %639
    %v641 = vmul.f32 %v640, 0.03125
    %v642 = vadd.f32 %v641, 1e-05
    %v643 = vrsqrt.pop %v642
    %v644 = vmul.f32 %v643, %v620
    %646 = vset.pattern.permute.xlu0 0
    %647 = vperm.xlu0 %646, %v644
    %v648 = vpop.permute.xlu0 %647
    %v650 = vmul.f32 %v632, %v648
    %v651 = vmul.f32 %v633, %v648
    %653 = vset.pattern.permute.xlu0 0
    %654 = vperm.xlu0 %653, %v621
    %v655 = vpop.permute.xlu0 %654
    %v657 = vadd.f32 %v650, %v655
    %v658 = vadd.f32 %v651, %v655
    %v660 = vadd.f32 %v657, %v43
    %v661 = vadd.f32 %v658, %v45
    %v662 = vmax.f32 %v660, 0.0
    %v663 = vmax.f32 %v661, 0.0
    %v666 = vcombine.low %v662, %v663
    %668 = vst [vmem:[#allocation5] sm:$0xff] %v666
    // Predicated region
    $region38: #{tpu_custom_call.1} parent=1 // pred_check
      _
    $region39: #{tpu_custom_call.1} parent=1 // pred_check_branch
      %670 = sbr.rel (0) target = $region41
    $region40: #{tpu_custom_call.1} parent=1 // pred_region
      %s672 = ssub.s32 128, 128
      %673 = vsyncadd [#allocation4], %s672
      %s675 = sshll.u32 [#allocation5], 4
      %s676 = int_to_ptr.vmem [resolvable:$true] %s675
      %678 = dma.vmem_to_hbm [thread:$0]  %s676, 128, %s8, [#allocation4]
    $region41: #{tpu_custom_call.1} parent=1 // pred_fallthru
      _
    // Predicated region
    $region42: #{tpu_custom_call.1} parent=1 // pred_check
      _
    $region43: #{tpu_custom_call.1} parent=1 // pred_check_branch
      %680 = sbr.rel (0) target = $region45
    $region44: #{tpu_custom_call.1} parent=1 // pred_region
      %681 = dma.done [#allocation4], 128
    $region45: #{tpu_custom_call.1} parent=1 // pred_fallthru
      _
    %682 = vsyncpa [#allocation3], 1
    %683 = vsyncpa [#allocation4], 1

</llo_original>
